<compile_context>
chip_gen: v6e
topology: v6e:2x2x1
jax: 0.10.0
libtpu: 0.0.40
codegen_flags: <defaults>
</compile_context>

<pallas_src>
import functools

import jax
import jax.numpy as jnp
from jax import lax
from jax.experimental import pallas as pl
from jax.experimental.pallas import tpu as pltpu


def _shuffle_block_kernel(H, W, NP,
                          x_ref,
                          w1_ref, s1_ref, b1_ref,
                          wdw_ref, s2_ref, b2_ref,
                          w3_ref, s3_ref, b3_ref,
                          out_ref):
    """One batch pair.

    x_ref / out_ref : (H, LANES) float32, LANES = 2 * 2 * NP * W (=128 here).
      lane = k*(2*NP*W) + side*(NP*W) + n*W + w ; side 0 = right-branch channel k,
      side 1 = left-branch (identity) channel k.
    Weights in SMEM: w1, w3 (2,2); wdw (2,9); folded-BN scale/bias s*, b* (2,).
    """
    LANES = 2 * 2 * NP * W          # 128
    HALF = LANES // 2               # 64  -> roll by HALF swaps channel k=0 <-> k=1
    SEG = NP * W                    # 32  -> first SEG lanes of each half are "right"

    x = x_ref[...]                  # (H, 128), single dense load

    # Index helpers / masks (built once per grid step, hoisted out of all loops).
    lane = lax.broadcasted_iota(jnp.int32, (H, LANES), 1)
    row = lax.broadcasted_iota(jnp.int32, (H, LANES), 0)
    w_in = lane % W                           # column inside each W-wide lane segment
    is_k0 = lane < HALF                       # lanes of channel-pair index k == 0
    is_right = (lane % HALF) < SEG            # lanes carrying right-branch data

    def sel(v0, v1):                          # per-lane scalar: k==0 lanes get v0, else v1
        return jnp.where(is_k0, v0, v1)

    # ---- right branch: 1x1 conv + folded BN + ReLU --------------------------------
    xs = pltpu.roll(x, HALF, axis=1)          # channel partner (R0 <-> R1, same n, w)
    y1 = sel(w1_ref[0, 0], w1_ref[1, 1]) * x + sel(w1_ref[0, 1], w1_ref[1, 0]) * xs
    y1 = jnp.maximum(sel(s1_ref[0], s1_ref[1]) * y1 + sel(b1_ref[0], b1_ref[1]), 0.0)
    # Left-branch lanes now hold garbage; it never leaks into right lanes because every
    # cross-segment read below is masked out (it corresponds to an out-of-image tap).

    # ---- right branch: depthwise 3x3 conv (stride 1, pad 1) + BN + ReLU ------------
    acc = jnp.zeros((H, LANES), jnp.float32)
    for dh in (-1, 0, 1):
        rok = (row + dh >= 0) & (row + dh < H)
        yh = y1 if dh == 0 else pltpu.roll(y1, (-dh) % H, axis=0)     # sublane shift
        for dw in (-1, 0, 1):
            ok = rok & (w_in + dw >= 0) & (w_in + dw < W)
            sh = yh if dw == 0 else pltpu.roll(yh, (-dw) % LANES, axis=1)  # lane shift
            t = 3 * (dh + 1) + (dw + 1)
            acc = acc + jnp.where(ok, sel(wdw_ref[0, t], wdw_ref[1, t]) * sh, 0.0)
    y2 = jnp.maximum(sel(s2_ref[0], s2_ref[1]) * acc + sel(b2_ref[0], b2_ref[1]), 0.0)

    # ---- right branch: final 1x1 conv + BN + ReLU ----------------------------------
    y2s = pltpu.roll(y2, HALF, axis=1)
    y3 = sel(w3_ref[0, 0], w3_ref[1, 1]) * y2 + sel(w3_ref[0, 1], w3_ref[1, 0]) * y2s
    y3 = jnp.maximum(sel(s3_ref[0], s3_ref[1]) * y3 + sel(b3_ref[0], b3_ref[1]), 0.0)

    # ---- concat + channel_shuffle: encoded in the lane layout (undone by wrapper) ---
    out_ref[...] = jnp.where(is_right, y3, x)     # single dense (H, 128) store


def shuffle_block(x, params):
    """Pallas ShuffleBlock forward. x: (N, C, H, W) float32, NCHW."""
    N, C, H, W = x.shape
    Cl = C // 2
    Cr = C - Cl
    assert Cl == Cr == 2, "kernel specialized for C=4 (shuffle groups=2, Cr=Cl=2)"
    NP = 2                                   # batch elements packed per grid step
    assert N % NP == 0, "kernel packs batch elements in pairs"
    NB = N // NP
    LANES = 2 * 2 * NP * W
    assert LANES == 128, "lane packing sized for W=16"

    x = x.astype(jnp.float32)
    xr = x[:, Cl:].reshape(NB, NP, Cr, H, W)
    xl = x[:, :Cl].reshape(NB, NP, Cl, H, W)
    # packed[p, n, k, side, h, w]  with side 0 = right-branch channel k, 1 = left.
    packed = jnp.stack([xr, xl], axis=3)                       # (NB, NP, 2, 2, H, W)
    # -> (p, h, k, side, n, w) -> (NB*H, 128): lane = k*64 + side*32 + n*16 + w
    xin = packed.transpose(0, 4, 2, 3, 1, 5).reshape(NB * H, LANES)

    smem = pl.BlockSpec(memory_space=pltpu.MemorySpace.SMEM)
    kernel = functools.partial(_shuffle_block_kernel, H, W, NP)

    out2d = pl.pallas_call(
        kernel,
        out_shape=jax.ShapeDtypeStruct((NB * H, LANES), jnp.float32),
        grid=(NB,),
        in_specs=[
            pl.BlockSpec((H, LANES), lambda i: (i, 0)),
            smem, smem, smem,   # w1, s1, b1
            smem, smem, smem,   # wdw, s2, b2
            smem, smem, smem,   # w3, s3, b3
        ],
        out_specs=pl.BlockSpec((H, LANES), lambda i: (i, 0)),
        compiler_params=pltpu.CompilerParams(dimension_semantics=("parallel",)),
    )(xin,
      params["w1"], params["s1"], params["b1"],
      params["wdw"].reshape(Cr, 9), params["s2"], params["b2"],
      params["w3"], params["s3"], params["b3"])

    # Unpack: (NB*H, 128) -> (p, h, k, side, n, w) -> (p, n, k, side, h, w); channel
    # shuffle (groups=2) maps side=left -> channel 2k, side=right -> 2k+1, i.e. flip
    # the side axis then merge (k, side) into C.
    out = out2d.reshape(NB, H, 2, 2, NP, W).transpose(0, 4, 2, 3, 1, 5)
    out = out[:, :, :, ::-1]
    return out.reshape(N, C, H, W)


def ref_shuffle_block(x, params):
    """Pure-JAX reference matching the PyTorch forward semantics."""
    N, C, H, W = x.shape
    Cl = C // 2
    x_l, x_r = x[:, :Cl], x[:, Cl:]

    def bn_act(y, s, b):
        return jax.nn.relu(s[None, :, None, None] * y + b[None, :, None, None])

    y = jnp.einsum('oc,nchw->nohw', params["w1"], x_r)
    y = bn_act(y, params["s1"], params["b1"])
    yp = jnp.pad(y, ((0, 0), (0, 0), (1, 1), (1, 1)))
    y2 = jnp.zeros_like(y)
    for dh in range(3):
        for dw in range(3):
            y2 = y2 + params["wdw"][None, :, dh, dw, None, None] * yp[:, :, dh:dh + H, dw:dw + W]
    y2 = bn_act(y2, params["s2"], params["b2"])
    y3 = jnp.einsum('oc,nchw->nohw', params["w3"], y2)
    y3 = bn_act(y3, params["s3"], params["b3"])
    cat = jnp.concatenate([x_l, y3], axis=1)
    # channel_shuffle, groups=2
    out = cat.reshape(N, 2, C // 2, H, W).transpose(0, 2, 1, 3, 4).reshape(N, C, H, W)
    return out


if __name__ == "__main__":
    N, C, H, W = 2, 4, 16, 16          # x: (2, 4, 16, 16), stride=1, in=out channels
    Cl = C // 2
    Cr = C - Cl

    key = jax.random.PRNGKey(0)
    ks = jax.random.split(key, 16)
    x = jax.random.normal(ks[0], (N, C, H, W), jnp.float32)

    def bn_fold(kg, kb, km, kv, ch):
        gamma = 1.0 + 0.1 * jax.random.normal(kg, (ch,), jnp.float32)
        beta = 0.1 * jax.random.normal(kb, (ch,), jnp.float32)
        mean = 0.1 * jax.random.normal(km, (ch,), jnp.float32)
        var = 1.0 + 0.1 * jax.random.uniform(kv, (ch,), jnp.float32)
        scale = gamma / jnp.sqrt(var + 1e-5)
        return scale, beta - mean * scale

    s1, b1 = bn_fold(ks[4], ks[5], ks[6], ks[7], Cr)
    s2, b2 = bn_fold(ks[8], ks[9], ks[10], ks[11], Cr)
    s3, b3 = bn_fold(ks[12], ks[13], ks[14], ks[15], Cr)

    params = dict(
        w1=0.5 * jax.random.normal(ks[1], (Cr, Cr), jnp.float32),     # 1x1 conv weight
        wdw=0.3 * jax.random.normal(ks[2], (Cr, 3, 3), jnp.float32),  # 3x3 depthwise weight
        w3=0.5 * jax.random.normal(ks[3], (Cr, Cr), jnp.float32),     # 1x1 conv weight
        s1=s1, b1=b1, s2=s2, b2=b2, s3=s3, b3=b3,                     # folded BN scale/bias
    )

    out = jax.block_until_ready(shuffle_block(x, params))
    ref = ref_shuffle_block(x, params)
    assert out.shape == (N, C, H, W)
    assert jnp.allclose(out, ref, atol=1e-5, rtol=1e-5), float(jnp.max(jnp.abs(out - ref)))
    print("KERNEL_OK")
</pallas_src>

<mosaic_0001>
module attributes {stable_mosaic.version = 11 : i64} {
  func.func @_shuffle_block_kernel(%arg0: i32, %arg1: memref<16x128xf32, #tpu.memory_space<vmem>>, %arg2: memref<2x2xf32, #tpu.memory_space<smem>>, %arg3: memref<2xf32, #tpu.memory_space<smem>>, %arg4: memref<2xf32, #tpu.memory_space<smem>>, %arg5: memref<2x9xf32, #tpu.memory_space<smem>>, %arg6: memref<2xf32, #tpu.memory_space<smem>>, %arg7: memref<2xf32, #tpu.memory_space<smem>>, %arg8: memref<2x2xf32, #tpu.memory_space<smem>>, %arg9: memref<2xf32, #tpu.memory_space<smem>>, %arg10: memref<2xf32, #tpu.memory_space<smem>>, %arg11: memref<16x128xf32, #tpu.memory_space<vmem>>) attributes {dimension_semantics = [#tpu.dimension_semantics<parallel>], iteration_bounds = array<i64: 1>, scalar_prefetch = 0 : i64, scratch_operands = 0 : i64, tpu.core_type = #tpu.core_type<tc>, window_params = [{transform_indices = @transform_0, window_bounds = array<i64: 16, 128>}, {transform_indices = @transform_1, window_bounds = array<i64: 2, 2>}, {transform_indices = @transform_2, window_bounds = array<i64: 2>}, {transform_indices = @transform_3, window_bounds = array<i64: 2>}, {transform_indices = @transform_4, window_bounds = array<i64: 2, 9>}, {transform_indices = @transform_5, window_bounds = array<i64: 2>}, {transform_indices = @transform_6, window_bounds = array<i64: 2>}, {transform_indices = @transform_7, window_bounds = array<i64: 2, 2>}, {transform_indices = @transform_8, window_bounds = array<i64: 2>}, {transform_indices = @transform_9, window_bounds = array<i64: 2>}, {transform_indices = @transform_10, window_bounds = array<i64: 16, 128>}]} {
    %c0 = arith.constant 0 : index
    %c0_0 = arith.constant 0 : index
    %0 = vector.load %arg1[%c0, %c0_0] : memref<16x128xf32, #tpu.memory_space<vmem>>, vector<16x128xf32>
    %1 = tpu.iota {dimensions = array<i32: 1>} : vector<16x128xi32>
    %2 = tpu.iota {dimensions = array<i32: 0>} : vector<16x128xi32>
    %c16_i32 = arith.constant 16 : i32
    %c0_i32 = arith.constant 0 : i32
    %3 = arith.cmpi eq, %c16_i32, %c0_i32 : i32
    %c1_i32 = arith.constant 1 : i32
    %4 = arith.select %3, %c1_i32, %c16_i32 : i32
    %5 = vector.broadcast %4 : i32 to vector<16x128xi32>
    %6 = arith.remsi %1, %5 : vector<16x128xi32>
    %c0_i32_1 = arith.constant 0 : i32
    %7 = vector.broadcast %c0_i32_1 : i32 to vector<16x128xi32>
    %8 = arith.cmpi ne, %6, %7 : vector<16x128xi32>
    %c0_i32_2 = arith.constant 0 : i32
    %9 = vector.broadcast %c0_i32_2 : i32 to vector<16x128xi32>
    %10 = arith.cmpi slt, %6, %9 : vector<16x128xi32>
    %c0_i32_3 = arith.constant 0 : i32
    %11 = arith.cmpi slt, %4, %c0_i32_3 : i32
    %12 = vector.broadcast %11 : i1 to vector<16x128xi1>
    %13 = vector.broadcast %12 : vector<16x128xi1> to vector<16x128xi1>
    %14 = arith.xori %10, %13 : vector<16x128xi1>
    %15 = arith.andi %14, %8 : vector<16x128xi1>
    %16 = vector.broadcast %4 : i32 to vector<16x128xi32>
    %17 = arith.addi %6, %16 : vector<16x128xi32>
    %18 = arith.select %15, %17, %6 : vector<16x128xi1>, vector<16x128xi32>
    %c64_i32 = arith.constant 64 : i32
    %19 = vector.broadcast %c64_i32 : i32 to vector<16x128xi32>
    %20 = arith.cmpi slt, %1, %19 : vector<16x128xi32>
    %c64_i32_4 = arith.constant 64 : i32
    %c0_i32_5 = arith.constant 0 : i32
    %21 = arith.cmpi eq, %c64_i32_4, %c0_i32_5 : i32
    %c1_i32_6 = arith.constant 1 : i32
    %22 = arith.select %21, %c1_i32_6, %c64_i32_4 : i32
    %23 = vector.broadcast %22 : i32 to vector<16x128xi32>
    %24 = arith.remsi %1, %23 : vector<16x128xi32>
    %c0_i32_7 = arith.constant 0 : i32
    %25 = vector.broadcast %c0_i32_7 : i32 to vector<16x128xi32>
    %26 = arith.cmpi ne, %24, %25 : vector<16x128xi32>
    %c0_i32_8 = arith.constant 0 : i32
    %27 = vector.broadcast %c0_i32_8 : i32 to vector<16x128xi32>
    %28 = arith.cmpi slt, %24, %27 : vector<16x128xi32>
    %c0_i32_9 = arith.constant 0 : i32
    %29 = arith.cmpi slt, %22, %c0_i32_9 : i32
    %30 = vector.broadcast %29 : i1 to vector<16x128xi1>
    %31 = vector.broadcast %30 : vector<16x128xi1> to vector<16x128xi1>
    %32 = arith.xori %28, %31 : vector<16x128xi1>
    %33 = arith.andi %32, %26 : vector<16x128xi1>
    %34 = vector.broadcast %22 : i32 to vector<16x128xi32>
    %35 = arith.addi %24, %34 : vector<16x128xi32>
    %36 = arith.select %33, %35, %24 : vector<16x128xi1>, vector<16x128xi32>
    %c32_i32 = arith.constant 32 : i32
    %37 = vector.broadcast %c32_i32 : i32 to vector<16x128xi32>
    %38 = arith.cmpi slt, %36, %37 : vector<16x128xi32>
    %c64_i32_10 = arith.constant 64 : i32
    %39 = tpu.dynamic_rotate %0 by %c64_i32_10 dim 1 : vector<16x128xf32>, i32 -> vector<16x128xf32>
    %c0_11 = arith.constant 0 : index
    %c0_12 = arith.constant 0 : index
    %40 = memref.load %arg2[%c0_11, %c0_12] : memref<2x2xf32, #tpu.memory_space<smem>>
    %c1 = arith.constant 1 : index
    %c1_13 = arith.constant 1 : index
    %41 = memref.load %arg2[%c1, %c1_13] : memref<2x2xf32, #tpu.memory_space<smem>>
    %42 = vector.broadcast %40 : f32 to vector<16x128xf32>
    %43 = vector.broadcast %41 : f32 to vector<16x128xf32>
    %44 = arith.select %20, %42, %43 : vector<16x128xi1>, vector<16x128xf32>
    %45 = arith.mulf %44, %0 : vector<16x128xf32>
    %c0_14 = arith.constant 0 : index
    %c1_15 = arith.constant 1 : index
    %46 = memref.load %arg2[%c0_14, %c1_15] : memref<2x2xf32, #tpu.memory_space<smem>>
    %c1_16 = arith.constant 1 : index
    %c0_17 = arith.constant 0 : index
    %47 = memref.load %arg2[%c1_16, %c0_17] : memref<2x2xf32, #tpu.memory_space<smem>>
    %48 = vector.broadcast %46 : f32 to vector<16x128xf32>
    %49 = vector.broadcast %47 : f32 to vector<16x128xf32>
    %50 = arith.select %20, %48, %49 : vector<16x128xi1>, vector<16x128xf32>
    %51 = arith.mulf %50, %39 : vector<16x128xf32>
    %52 = arith.addf %45, %51 : vector<16x128xf32>
    %c0_18 = arith.constant 0 : index
    %53 = memref.load %arg3[%c0_18] : memref<2xf32, #tpu.memory_space<smem>>
    %c1_19 = arith.constant 1 : index
    %54 = memref.load %arg3[%c1_19] : memref<2xf32, #tpu.memory_space<smem>>
    %55 = vector.broadcast %53 : f32 to vector<16x128xf32>
    %56 = vector.broadcast %54 : f32 to vector<16x128xf32>
    %57 = arith.select %20, %55, %56 : vector<16x128xi1>, vector<16x128xf32>
    %58 = arith.mulf %57, %52 : vector<16x128xf32>
    %c0_20 = arith.constant 0 : index
    %59 = memref.load %arg4[%c0_20] : memref<2xf32, #tpu.memory_space<smem>>
    %c1_21 = arith.constant 1 : index
    %60 = memref.load %arg4[%c1_21] : memref<2xf32, #tpu.memory_space<smem>>
    %61 = vector.broadcast %59 : f32 to vector<16x128xf32>
    %62 = vector.broadcast %60 : f32 to vector<16x128xf32>
    %63 = arith.select %20, %61, %62 : vector<16x128xi1>, vector<16x128xf32>
    %64 = arith.addf %58, %63 : vector<16x128xf32>
    %cst = arith.constant 0.000000e+00 : f32
    %65 = vector.broadcast %cst : f32 to vector<16x128xf32>
    %66 = arith.maximumf %64, %65 : vector<16x128xf32>
    %cst_22 = arith.constant 0.000000e+00 : f32
    %67 = vector.broadcast %cst_22 : f32 to vector<16x128xf32>
    %c-1_i32 = arith.constant -1 : i32
    %68 = vector.broadcast %c-1_i32 : i32 to vector<16x128xi32>
    %69 = arith.addi %2, %68 : vector<16x128xi32>
    %c0_i32_23 = arith.constant 0 : i32
    %70 = vector.broadcast %c0_i32_23 : i32 to vector<16x128xi32>
    %71 = arith.cmpi sge, %69, %70 : vector<16x128xi32>
    %c-1_i32_24 = arith.constant -1 : i32
    %72 = vector.broadcast %c-1_i32_24 : i32 to vector<16x128xi32>
    %73 = arith.addi %2, %72 : vector<16x128xi32>
    %c16_i32_25 = arith.constant 16 : i32
    %74 = vector.broadcast %c16_i32_25 : i32 to vector<16x128xi32>
    %75 = arith.cmpi slt, %73, %74 : vector<16x128xi32>
    %76 = arith.andi %71, %75 : vector<16x128xi1>
    %c1_i32_26 = arith.constant 1 : i32
    %77 = tpu.dynamic_rotate %66 by %c1_i32_26 dim 0 : vector<16x128xf32>, i32 -> vector<16x128xf32>
    %c-1_i32_27 = arith.constant -1 : i32
    %78 = vector.broadcast %c-1_i32_27 : i32 to vector<16x128xi32>
    %79 = arith.addi %18, %78 : vector<16x128xi32>
    %c0_i32_28 = arith.constant 0 : i32
    %80 = vector.broadcast %c0_i32_28 : i32 to vector<16x128xi32>
    %81 = arith.cmpi sge, %79, %80 : vector<16x128xi32>
    %82 = arith.andi %76, %81 : vector<16x128xi1>
    %c-1_i32_29 = arith.constant -1 : i32
    %83 = vector.broadcast %c-1_i32_29 : i32 to vector<16x128xi32>
    %84 = arith.addi %18, %83 : vector<16x128xi32>
    %c16_i32_30 = arith.constant 16 : i32
    %85 = vector.broadcast %c16_i32_30 : i32 to vector<16x128xi32>
    %86 = arith.cmpi slt, %84, %85 : vector<16x128xi32>
    %87 = arith.andi %82, %86 : vector<16x128xi1>
    %c1_i32_31 = arith.constant 1 : i32
    %88 = tpu.dynamic_rotate %77 by %c1_i32_31 dim 1 : vector<16x128xf32>, i32 -> vector<16x128xf32>
    %c0_32 = arith.constant 0 : index
    %c0_33 = arith.constant 0 : index
    %89 = memref.load %arg5[%c0_32, %c0_33] : memref<2x9xf32, #tpu.memory_space<smem>>
    %c1_34 = arith.constant 1 : index
    %c0_35 = arith.constant 0 : index
    %90 = memref.load %arg5[%c1_34, %c0_35] : memref<2x9xf32, #tpu.memory_space<smem>>
    %91 = vector.broadcast %89 : f32 to vector<16x128xf32>
    %92 = vector.broadcast %90 : f32 to vector<16x128xf32>
    %93 = arith.select %20, %91, %92 : vector<16x128xi1>, vector<16x128xf32>
    %94 = arith.mulf %93, %88 : vector<16x128xf32>
    %cst_36 = arith.constant 0.000000e+00 : f32
    %95 = vector.broadcast %cst_36 : f32 to vector<16x128xf32>
    %96 = arith.select %87, %94, %95 : vector<16x128xi1>, vector<16x128xf32>
    %97 = arith.addf %67, %96 : vector<16x128xf32>
    %c0_i32_37 = arith.constant 0 : i32
    %98 = vector.broadcast %c0_i32_37 : i32 to vector<16x128xi32>
    %99 = arith.addi %18, %98 : vector<16x128xi32>
    %c0_i32_38 = arith.constant 0 : i32
    %100 = vector.broadcast %c0_i32_38 : i32 to vector<16x128xi32>
    %101 = arith.cmpi sge, %99, %100 : vector<16x128xi32>
    %102 = arith.andi %76, %101 : vector<16x128xi1>
    %c0_i32_39 = arith.constant 0 : i32
    %103 = vector.broadcast %c0_i32_39 : i32 to vector<16x128xi32>
    %104 = arith.addi %18, %103 : vector<16x128xi32>
    %c16_i32_40 = arith.constant 16 : i32
    %105 = vector.broadcast %c16_i32_40 : i32 to vector<16x128xi32>
    %106 = arith.cmpi slt, %104, %105 : vector<16x128xi32>
    %107 = arith.andi %102, %106 : vector<16x128xi1>
    %c0_41 = arith.constant 0 : index
    %c1_42 = arith.constant 1 : index
    %108 = memref.load %arg5[%c0_41, %c1_42] : memref<2x9xf32, #tpu.memory_space<smem>>
    %c1_43 = arith.constant 1 : index
    %c1_44 = arith.constant 1 : index
    %109 = memref.load %arg5[%c1_43, %c1_44] : memref<2x9xf32, #tpu.memory_space<smem>>
    %110 = vector.broadcast %108 : f32 to vector<16x128xf32>
    %111 = vector.broadcast %109 : f32 to vector<16x128xf32>
    %112 = arith.select %20, %110, %111 : vector<16x128xi1>, vector<16x128xf32>
    %113 = arith.mulf %112, %77 : vector<16x128xf32>
    %cst_45 = arith.constant 0.000000e+00 : f32
    %114 = vector.broadcast %cst_45 : f32 to vector<16x128xf32>
    %115 = arith.select %107, %113, %114 : vector<16x128xi1>, vector<16x128xf32>
    %116 = arith.addf %97, %115 : vector<16x128xf32>
    %c1_i32_46 = arith.constant 1 : i32
    %117 = vector.broadcast %c1_i32_46 : i32 to vector<16x128xi32>
    %118 = arith.addi %18, %117 : vector<16x128xi32>
    %c0_i32_47 = arith.constant 0 : i32
    %119 = vector.broadcast %c0_i32_47 : i32 to vector<16x128xi32>
    %120 = arith.cmpi sge, %118, %119 : vector<16x128xi32>
    %121 = arith.andi %76, %120 : vector<16x128xi1>
    %c1_i32_48 = arith.constant 1 : i32
    %122 = vector.broadcast %c1_i32_48 : i32 to vector<16x128xi32>
    %123 = arith.addi %18, %122 : vector<16x128xi32>
    %c16_i32_49 = arith.constant 16 : i32
    %124 = vector.broadcast %c16_i32_49 : i32 to vector<16x128xi32>
    %125 = arith.cmpi slt, %123, %124 : vector<16x128xi32>
    %126 = arith.andi %121, %125 : vector<16x128xi1>
    %c127_i32 = arith.constant 127 : i32
    %127 = tpu.dynamic_rotate %77 by %c127_i32 dim 1 : vector<16x128xf32>, i32 -> vector<16x128xf32>
    %c0_50 = arith.constant 0 : index
    %c2 = arith.constant 2 : index
    %128 = memref.load %arg5[%c0_50, %c2] : memref<2x9xf32, #tpu.memory_space<smem>>
    %c1_51 = arith.constant 1 : index
    %c2_52 = arith.constant 2 : index
    %129 = memref.load %arg5[%c1_51, %c2_52] : memref<2x9xf32, #tpu.memory_space<smem>>
    %130 = vector.broadcast %128 : f32 to vector<16x128xf32>
    %131 = vector.broadcast %129 : f32 to vector<16x128xf32>
    %132 = arith.select %20, %130, %131 : vector<16x128xi1>, vector<16x128xf32>
    %133 = arith.mulf %132, %127 : vector<16x128xf32>
    %cst_53 = arith.constant 0.000000e+00 : f32
    %134 = vector.broadcast %cst_53 : f32 to vector<16x128xf32>
    %135 = arith.select %126, %133, %134 : vector<16x128xi1>, vector<16x128xf32>
    %136 = arith.addf %116, %135 : vector<16x128xf32>
    %c0_i32_54 = arith.constant 0 : i32
    %137 = vector.broadcast %c0_i32_54 : i32 to vector<16x128xi32>
    %138 = arith.addi %2, %137 : vector<16x128xi32>
    %c0_i32_55 = arith.constant 0 : i32
    %139 = vector.broadcast %c0_i32_55 : i32 to vector<16x128xi32>
    %140 = arith.cmpi sge, %138, %139 : vector<16x128xi32>
    %c0_i32_56 = arith.constant 0 : i32
    %141 = vector.broadcast %c0_i32_56 : i32 to vector<16x128xi32>
    %142 = arith.addi %2, %141 : vector<16x128xi32>
    %c16_i32_57 = arith.constant 16 : i32
    %143 = vector.broadcast %c16_i32_57 : i32 to vector<16x128xi32>
    %144 = arith.cmpi slt, %142, %143 : vector<16x128xi32>
    %145 = arith.andi %140, %144 : vector<16x128xi1>
    %c-1_i32_58 = arith.constant -1 : i32
    %146 = vector.broadcast %c-1_i32_58 : i32 to vector<16x128xi32>
    %147 = arith.addi %18, %146 : vector<16x128xi32>
    %c0_i32_59 = arith.constant 0 : i32
    %148 = vector.broadcast %c0_i32_59 : i32 to vector<16x128xi32>
    %149 = arith.cmpi sge, %147, %148 : vector<16x128xi32>
    %150 = arith.andi %145, %149 : vector<16x128xi1>
    %c-1_i32_60 = arith.constant -1 : i32
    %151 = vector.broadcast %c-1_i32_60 : i32 to vector<16x128xi32>
    %152 = arith.addi %18, %151 : vector<16x128xi32>
    %c16_i32_61 = arith.constant 16 : i32
    %153 = vector.broadcast %c16_i32_61 : i32 to vector<16x128xi32>
    %154 = arith.cmpi slt, %152, %153 : vector<16x128xi32>
    %155 = arith.andi %150, %154 : vector<16x128xi1>
    %c1_i32_62 = arith.constant 1 : i32
    %156 = tpu.dynamic_rotate %66 by %c1_i32_62 dim 1 : vector<16x128xf32>, i32 -> vector<16x128xf32>
    %c0_63 = arith.constant 0 : index
    %c3 = arith.constant 3 : index
    %157 = memref.load %arg5[%c0_63, %c3] : memref<2x9xf32, #tpu.memory_space<smem>>
    %c1_64 = arith.constant 1 : index
    %c3_65 = arith.constant 3 : index
    %158 = memref.load %arg5[%c1_64, %c3_65] : memref<2x9xf32, #tpu.memory_space<smem>>
    %159 = vector.broadcast %157 : f32 to vector<16x128xf32>
    %160 = vector.broadcast %158 : f32 to vector<16x128xf32>
    %161 = arith.select %20, %159, %160 : vector<16x128xi1>, vector<16x128xf32>
    %162 = arith.mulf %161, %156 : vector<16x128xf32>
    %cst_66 = arith.constant 0.000000e+00 : f32
    %163 = vector.broadcast %cst_66 : f32 to vector<16x128xf32>
    %164 = arith.select %155, %162, %163 : vector<16x128xi1>, vector<16x128xf32>
    %165 = arith.addf %136, %164 : vector<16x128xf32>
    %c0_i32_67 = arith.constant 0 : i32
    %166 = vector.broadcast %c0_i32_67 : i32 to vector<16x128xi32>
    %167 = arith.addi %18, %166 : vector<16x128xi32>
    %c0_i32_68 = arith.constant 0 : i32
    %168 = vector.broadcast %c0_i32_68 : i32 to vector<16x128xi32>
    %169 = arith.cmpi sge, %167, %168 : vector<16x128xi32>
    %170 = arith.andi %145, %169 : vector<16x128xi1>
    %c0_i32_69 = arith.constant 0 : i32
    %171 = vector.broadcast %c0_i32_69 : i32 to vector<16x128xi32>
    %172 = arith.addi %18, %171 : vector<16x128xi32>
    %c16_i32_70 = arith.constant 16 : i32
    %173 = vector.broadcast %c16_i32_70 : i32 to vector<16x128xi32>
    %174 = arith.cmpi slt, %172, %173 : vector<16x128xi32>
    %175 = arith.andi %170, %174 : vector<16x128xi1>
    %c0_71 = arith.constant 0 : index
    %c4 = arith.constant 4 : index
    %176 = memref.load %arg5[%c0_71, %c4] : memref<2x9xf32, #tpu.memory_space<smem>>
    %c1_72 = arith.constant 1 : index
    %c4_73 = arith.constant 4 : index
    %177 = memref.load %arg5[%c1_72, %c4_73] : memref<2x9xf32, #tpu.memory_space<smem>>
    %178 = vector.broadcast %176 : f32 to vector<16x128xf32>
    %179 = vector.broadcast %177 : f32 to vector<16x128xf32>
    %180 = arith.select %20, %178, %179 : vector<16x128xi1>, vector<16x128xf32>
    %181 = arith.mulf %180, %66 : vector<16x128xf32>
    %cst_74 = arith.constant 0.000000e+00 : f32
    %182 = vector.broadcast %cst_74 : f32 to vector<16x128xf32>
    %183 = arith.select %175, %181, %182 : vector<16x128xi1>, vector<16x128xf32>
    %184 = arith.addf %165, %183 : vector<16x128xf32>
    %c1_i32_75 = arith.constant 1 : i32
    %185 = vector.broadcast %c1_i32_75 : i32 to vector<16x128xi32>
    %186 = arith.addi %18, %185 : vector<16x128xi32>
    %c0_i32_76 = arith.constant 0 : i32
    %187 = vector.broadcast %c0_i32_76 : i32 to vector<16x128xi32>
    %188 = arith.cmpi sge, %186, %187 : vector<16x128xi32>
    %189 = arith.andi %145, %188 : vector<16x128xi1>
    %c1_i32_77 = arith.constant 1 : i32
    %190 = vector.broadcast %c1_i32_77 : i32 to vector<16x128xi32>
    %191 = arith.addi %18, %190 : vector<16x128xi32>
    %c16_i32_78 = arith.constant 16 : i32
    %192 = vector.broadcast %c16_i32_78 : i32 to vector<16x128xi32>
    %193 = arith.cmpi slt, %191, %192 : vector<16x128xi32>
    %194 = arith.andi %189, %193 : vector<16x128xi1>
    %c127_i32_79 = arith.constant 127 : i32
    %195 = tpu.dynamic_rotate %66 by %c127_i32_79 dim 1 : vector<16x128xf32>, i32 -> vector<16x128xf32>
    %c0_80 = arith.constant 0 : index
    %c5 = arith.constant 5 : index
    %196 = memref.load %arg5[%c0_80, %c5] : memref<2x9xf32, #tpu.memory_space<smem>>
    %c1_81 = arith.constant 1 : index
    %c5_82 = arith.constant 5 : index
    %197 = memref.load %arg5[%c1_81, %c5_82] : memref<2x9xf32, #tpu.memory_space<smem>>
    %198 = vector.broadcast %196 : f32 to vector<16x128xf32>
    %199 = vector.broadcast %197 : f32 to vector<16x128xf32>
    %200 = arith.select %20, %198, %199 : vector<16x128xi1>, vector<16x128xf32>
    %201 = arith.mulf %200, %195 : vector<16x128xf32>
    %cst_83 = arith.constant 0.000000e+00 : f32
    %202 = vector.broadcast %cst_83 : f32 to vector<16x128xf32>
    %203 = arith.select %194, %201, %202 : vector<16x128xi1>, vector<16x128xf32>
    %204 = arith.addf %184, %203 : vector<16x128xf32>
    %c1_i32_84 = arith.constant 1 : i32
    %205 = vector.broadcast %c1_i32_84 : i32 to vector<16x128xi32>
    %206 = arith.addi %2, %205 : vector<16x128xi32>
    %c0_i32_85 = arith.constant 0 : i32
    %207 = vector.broadcast %c0_i32_85 : i32 to vector<16x128xi32>
    %208 = arith.cmpi sge, %206, %207 : vector<16x128xi32>
    %c1_i32_86 = arith.constant 1 : i32
    %209 = vector.broadcast %c1_i32_86 : i32 to vector<16x128xi32>
    %210 = arith.addi %2, %209 : vector<16x128xi32>
    %c16_i32_87 = arith.constant 16 : i32
    %211 = vector.broadcast %c16_i32_87 : i32 to vector<16x128xi32>
    %212 = arith.cmpi slt, %210, %211 : vector<16x128xi32>
    %213 = arith.andi %208, %212 : vector<16x128xi1>
    %c15_i32 = arith.constant 15 : i32
    %214 = tpu.dynamic_rotate %66 by %c15_i32 dim 0 : vector<16x128xf32>, i32 -> vector<16x128xf32>
    %c-1_i32_88 = arith.constant -1 : i32
    %215 = vector.broadcast %c-1_i32_88 : i32 to vector<16x128xi32>
    %216 = arith.addi %18, %215 : vector<16x128xi32>
    %c0_i32_89 = arith.constant 0 : i32
    %217 = vector.broadcast %c0_i32_89 : i32 to vector<16x128xi32>
    %218 = arith.cmpi sge, %216, %217 : vector<16x128xi32>
    %219 = arith.andi %213, %218 : vector<16x128xi1>
    %c-1_i32_90 = arith.constant -1 : i32
    %220 = vector.broadcast %c-1_i32_90 : i32 to vector<16x128xi32>
    %221 = arith.addi %18, %220 : vector<16x128xi32>
    %c16_i32_91 = arith.constant 16 : i32
    %222 = vector.broadcast %c16_i32_91 : i32 to vector<16x128xi32>
    %223 = arith.cmpi slt, %221, %222 : vector<16x128xi32>
    %224 = arith.andi %219, %223 : vector<16x128xi1>
    %c1_i32_92 = arith.constant 1 : i32
    %225 = tpu.dynamic_rotate %214 by %c1_i32_92 dim 1 : vector<16x128xf32>, i32 -> vector<16x128xf32>
    %c0_93 = arith.constant 0 : index
    %c6 = arith.constant 6 : index
    %226 = memref.load %arg5[%c0_93, %c6] : memref<2x9xf32, #tpu.memory_space<smem>>
    %c1_94 = arith.constant 1 : index
    %c6_95 = arith.constant 6 : index
    %227 = memref.load %arg5[%c1_94, %c6_95] : memref<2x9xf32, #tpu.memory_space<smem>>
    %228 = vector.broadcast %226 : f32 to vector<16x128xf32>
    %229 = vector.broadcast %227 : f32 to vector<16x128xf32>
    %230 = arith.select %20, %228, %229 : vector<16x128xi1>, vector<16x128xf32>
    %231 = arith.mulf %230, %225 : vector<16x128xf32>
    %cst_96 = arith.constant 0.000000e+00 : f32
    %232 = vector.broadcast %cst_96 : f32 to vector<16x128xf32>
    %233 = arith.select %224, %231, %232 : vector<16x128xi1>, vector<16x128xf32>
    %234 = arith.addf %204, %233 : vector<16x128xf32>
    %c0_i32_97 = arith.constant 0 : i32
    %235 = vector.broadcast %c0_i32_97 : i32 to vector<16x128xi32>
    %236 = arith.addi %18, %235 : vector<16x128xi32>
    %c0_i32_98 = arith.constant 0 : i32
    %237 = vector.broadcast %c0_i32_98 : i32 to vector<16x128xi32>
    %238 = arith.cmpi sge, %236, %237 : vector<16x128xi32>
    %239 = arith.andi %213, %238 : vector<16x128xi1>
    %c0_i32_99 = arith.constant 0 : i32
    %240 = vector.broadcast %c0_i32_99 : i32 to vector<16x128xi32>
    %241 = arith.addi %18, %240 : vector<16x128xi32>
    %c16_i32_100 = arith.constant 16 : i32
    %242 = vector.broadcast %c16_i32_100 : i32 to vector<16x128xi32>
    %243 = arith.cmpi slt, %241, %242 : vector<16x128xi32>
    %244 = arith.andi %239, %243 : vector<16x128xi1>
    %c0_101 = arith.constant 0 : index
    %c7 = arith.constant 7 : index
    %245 = memref.load %arg5[%c0_101, %c7] : memref<2x9xf32, #tpu.memory_space<smem>>
    %c1_102 = arith.constant 1 : index
    %c7_103 = arith.constant 7 : index
    %246 = memref.load %arg5[%c1_102, %c7_103] : memref<2x9xf32, #tpu.memory_space<smem>>
    %247 = vector.broadcast %245 : f32 to vector<16x128xf32>
    %248 = vector.broadcast %246 : f32 to vector<16x128xf32>
    %249 = arith.select %20, %247, %248 : vector<16x128xi1>, vector<16x128xf32>
    %250 = arith.mulf %249, %214 : vector<16x128xf32>
    %cst_104 = arith.constant 0.000000e+00 : f32
    %251 = vector.broadcast %cst_104 : f32 to vector<16x128xf32>
    %252 = arith.select %244, %250, %251 : vector<16x128xi1>, vector<16x128xf32>
    %253 = arith.addf %234, %252 : vector<16x128xf32>
    %c1_i32_105 = arith.constant 1 : i32
    %254 = vector.broadcast %c1_i32_105 : i32 to vector<16x128xi32>
    %255 = arith.addi %18, %254 : vector<16x128xi32>
    %c0_i32_106 = arith.constant 0 : i32
    %256 = vector.broadcast %c0_i32_106 : i32 to vector<16x128xi32>
    %257 = arith.cmpi sge, %255, %256 : vector<16x128xi32>
    %258 = arith.andi %213, %257 : vector<16x128xi1>
    %c1_i32_107 = arith.constant 1 : i32
    %259 = vector.broadcast %c1_i32_107 : i32 to vector<16x128xi32>
    %260 = arith.addi %18, %259 : vector<16x128xi32>
    %c16_i32_108 = arith.constant 16 : i32
    %261 = vector.broadcast %c16_i32_108 : i32 to vector<16x128xi32>
    %262 = arith.cmpi slt, %260, %261 : vector<16x128xi32>
    %263 = arith.andi %258, %262 : vector<16x128xi1>
    %c127_i32_109 = arith.constant 127 : i32
    %264 = tpu.dynamic_rotate %214 by %c127_i32_109 dim 1 : vector<16x128xf32>, i32 -> vector<16x128xf32>
    %c0_110 = arith.constant 0 : index
    %c8 = arith.constant 8 : index
    %265 = memref.load %arg5[%c0_110, %c8] : memref<2x9xf32, #tpu.memory_space<smem>>
    %c1_111 = arith.constant 1 : index
    %c8_112 = arith.constant 8 : index
    %266 = memref.load %arg5[%c1_111, %c8_112] : memref<2x9xf32, #tpu.memory_space<smem>>
    %267 = vector.broadcast %265 : f32 to vector<16x128xf32>
    %268 = vector.broadcast %266 : f32 to vector<16x128xf32>
    %269 = arith.select %20, %267, %268 : vector<16x128xi1>, vector<16x128xf32>
    %270 = arith.mulf %269, %264 : vector<16x128xf32>
    %cst_113 = arith.constant 0.000000e+00 : f32
    %271 = vector.broadcast %cst_113 : f32 to vector<16x128xf32>
    %272 = arith.select %263, %270, %271 : vector<16x128xi1>, vector<16x128xf32>
    %273 = arith.addf %253, %272 : vector<16x128xf32>
    %c0_114 = arith.constant 0 : index
    %274 = memref.load %arg6[%c0_114] : memref<2xf32, #tpu.memory_space<smem>>
    %c1_115 = arith.constant 1 : index
    %275 = memref.load %arg6[%c1_115] : memref<2xf32, #tpu.memory_space<smem>>
    %276 = vector.broadcast %274 : f32 to vector<16x128xf32>
    %277 = vector.broadcast %275 : f32 to vector<16x128xf32>
    %278 = arith.select %20, %276, %277 : vector<16x128xi1>, vector<16x128xf32>
    %279 = arith.mulf %278, %273 : vector<16x128xf32>
    %c0_116 = arith.constant 0 : index
    %280 = memref.load %arg7[%c0_116] : memref<2xf32, #tpu.memory_space<smem>>
    %c1_117 = arith.constant 1 : index
    %281 = memref.load %arg7[%c1_117] : memref<2xf32, #tpu.memory_space<smem>>
    %282 = vector.broadcast %280 : f32 to vector<16x128xf32>
    %283 = vector.broadcast %281 : f32 to vector<16x128xf32>
    %284 = arith.select %20, %282, %283 : vector<16x128xi1>, vector<16x128xf32>
    %285 = arith.addf %279, %284 : vector<16x128xf32>
    %cst_118 = arith.constant 0.000000e+00 : f32
    %286 = vector.broadcast %cst_118 : f32 to vector<16x128xf32>
    %287 = arith.maximumf %285, %286 : vector<16x128xf32>
    %c64_i32_119 = arith.constant 64 : i32
    %288 = tpu.dynamic_rotate %287 by %c64_i32_119 dim 1 : vector<16x128xf32>, i32 -> vector<16x128xf32>
    %c0_120 = arith.constant 0 : index
    %c0_121 = arith.constant 0 : index
    %289 = memref.load %arg8[%c0_120, %c0_121] : memref<2x2xf32, #tpu.memory_space<smem>>
    %c1_122 = arith.constant 1 : index
    %c1_123 = arith.constant 1 : index
    %290 = memref.load %arg8[%c1_122, %c1_123] : memref<2x2xf32, #tpu.memory_space<smem>>
    %291 = vector.broadcast %289 : f32 to vector<16x128xf32>
    %292 = vector.broadcast %290 : f32 to vector<16x128xf32>
    %293 = arith.select %20, %291, %292 : vector<16x128xi1>, vector<16x128xf32>
    %294 = arith.mulf %293, %287 : vector<16x128xf32>
    %c0_124 = arith.constant 0 : index
    %c1_125 = arith.constant 1 : index
    %295 = memref.load %arg8[%c0_124, %c1_125] : memref<2x2xf32, #tpu.memory_space<smem>>
    %c1_126 = arith.constant 1 : index
    %c0_127 = arith.constant 0 : index
    %296 = memref.load %arg8[%c1_126, %c0_127] : memref<2x2xf32, #tpu.memory_space<smem>>
    %297 = vector.broadcast %295 : f32 to vector<16x128xf32>
    %298 = vector.broadcast %296 : f32 to vector<16x128xf32>
    %299 = arith.select %20, %297, %298 : vector<16x128xi1>, vector<16x128xf32>
    %300 = arith.mulf %299, %288 : vector<16x128xf32>
    %301 = arith.addf %294, %300 : vector<16x128xf32>
    %c0_128 = arith.constant 0 : index
    %302 = memref.load %arg9[%c0_128] : memref<2xf32, #tpu.memory_space<smem>>
    %c1_129 = arith.constant 1 : index
    %303 = memref.load %arg9[%c1_129] : memref<2xf32, #tpu.memory_space<smem>>
    %304 = vector.broadcast %302 : f32 to vector<16x128xf32>
    %305 = vector.broadcast %303 : f32 to vector<16x128xf32>
    %306 = arith.select %20, %304, %305 : vector<16x128xi1>, vector<16x128xf32>
    %307 = arith.mulf %306, %301 : vector<16x128xf32>
    %c0_130 = arith.constant 0 : index
    %308 = memref.load %arg10[%c0_130] : memref<2xf32, #tpu.memory_space<smem>>
    %c1_131 = arith.constant 1 : index
    %309 = memref.load %arg10[%c1_131] : memref<2xf32, #tpu.memory_space<smem>>
    %310 = vector.broadcast %308 : f32 to vector<16x128xf32>
    %311 = vector.broadcast %309 : f32 to vector<16x128xf32>
    %312 = arith.select %20, %310, %311 : vector<16x128xi1>, vector<16x128xf32>
    %313 = arith.addf %307, %312 : vector<16x128xf32>
    %cst_132 = arith.constant 0.000000e+00 : f32
    %314 = vector.broadcast %cst_132 : f32 to vector<16x128xf32>
    %315 = arith.maximumf %313, %314 : vector<16x128xf32>
    %316 = arith.select %38, %315, %0 : vector<16x128xi1>, vector<16x128xf32>
    %c0_133 = arith.constant 0 : index
    %c0_134 = arith.constant 0 : index
    %317 = vector.load %arg11[%c0_133, %c0_134] : memref<16x128xf32, #tpu.memory_space<vmem>>, vector<16x128xf32>
    tpu.vector_store %arg11[%c0_133, %c0_134], %316 {strides = array<i32>} : memref<16x128xf32, #tpu.memory_space<vmem>>, vector<16x128xf32>,
    return
  }
  func.func @transform_0(%arg0: i32) -> (i32, i32) {
    %c0_i32 = arith.constant 0 : i32
    %c0_i32_0 = arith.constant 0 : i32
    return %arg0, %c0_i32 : i32, i32
  }
  func.func @transform_1(%arg0: i32) -> (i32, i32) {
    %c0_i32 = arith.constant 0 : i32
    %c0_i32_0 = arith.constant 0 : i32
    %c0_i32_1 = arith.constant 0 : i32
    return %c0_i32, %c0_i32_0 : i32, i32
  }
  func.func @transform_2(%arg0: i32) -> i32 {
    %c0_i32 = arith.constant 0 : i32
    %c0_i32_0 = arith.constant 0 : i32
    return %c0_i32 : i32
  }
  func.func @transform_3(%arg0: i32) -> i32 {
    %c0_i32 = arith.constant 0 : i32
    %c0_i32_0 = arith.constant 0 : i32
    return %c0_i32 : i32
  }
  func.func @transform_4(%arg0: i32) -> (i32, i32) {
    %c0_i32 = arith.constant 0 : i32
    %c0_i32_0 = arith.constant 0 : i32
    %c0_i32_1 = arith.constant 0 : i32
    return %c0_i32, %c0_i32_0 : i32, i32
  }
  func.func @transform_5(%arg0: i32) -> i32 {
    %c0_i32 = arith.constant 0 : i32
    %c0_i32_0 = arith.constant 0 : i32
    return %c0_i32 : i32
  }
  func.func @transform_6(%arg0: i32) -> i32 {
    %c0_i32 = arith.constant 0 : i32
    %c0_i32_0 = arith.constant 0 : i32
    return %c0_i32 : i32
  }
  func.func @transform_7(%arg0: i32) -> (i32, i32) {
    %c0_i32 = arith.constant 0 : i32
    %c0_i32_0 = arith.constant 0 : i32
    %c0_i32_1 = arith.constant 0 : i32
    return %c0_i32, %c0_i32_0 : i32, i32
  }
  func.func @transform_8(%arg0: i32) -> i32 {
    %c0_i32 = arith.constant 0 : i32
    %c0_i32_0 = arith.constant 0 : i32
    return %c0_i32 : i32
  }
  func.func @transform_9(%arg0: i32) -> i32 {
    %c0_i32 = arith.constant 0 : i32
    %c0_i32_0 = arith.constant 0 : i32
    return %c0_i32 : i32
  }
  func.func @transform_10(%arg0: i32) -> (i32, i32) {
    %c0_i32 = arith.constant 0 : i32
    %c0_i32_0 = arith.constant 0 : i32
    return %arg0, %c0_i32 : i32, i32
  }
}

</mosaic_0001>

<llo_original>
// kernel: tpu_custom_call.1
$region0: #{tpu_custom_call.1}
  #allocation0 [shape = 'u32[]', space=smem, size = 0x4, offset = 0x4, fixed_abs, tag = 'smem constant byte address 0x4 - core index']
  #allocation1 [shape = 'u32[144,128]{1,0:T(1,128)}', space=vmem, size = 0x12000, scoped, tag = 'internal scratch']
  %s0 = inlined_call_operand.hbm [shape: f32[16,128], index: 0, kind: input, shape index: {}]
  %s1 = inlined_call_operand.hbm [shape: f32[2,2], index: 1, kind: input, shape index: {}]
  %s2 = inlined_call_operand.vmem [shape: f32[2], index: 2, kind: input, shape index: {}]
  %s3 = inlined_call_operand.hbm [shape: f32[2], index: 3, kind: input, shape index: {}]
  %s4 = inlined_call_operand.vmem [shape: f32[2,9], index: 4, kind: input, shape index: {}]
  %s5 = inlined_call_operand.vmem [shape: f32[2], index: 5, kind: input, shape index: {}]
  %s6 = inlined_call_operand.vmem [shape: f32[2], index: 6, kind: input, shape index: {}]
  %s7 = inlined_call_operand.vmem [shape: f32[2,2], index: 7, kind: input, shape index: {}]
  %s8 = inlined_call_operand.vmem [shape: f32[2], index: 8, kind: input, shape index: {}]
  %s9 = inlined_call_operand.vmem [shape: f32[2], index: 9, kind: input, shape index: {}]
  %s10 = inlined_call_operand.hbm [shape: f32[16,128], index: 10, kind: output, shape index: {}]
  %s11 = sld [smem:[#allocation0]]
  $region90: #{tpu_custom_call.1} parent=0
    _
  %s13 = ssub.s32 1, %s11
  %s14 = scalar_select 0, %s13, %s11
  $region1: #{tpu_custom_call.1} parent=0
    #allocation2 [shape = 'u8[8192]{0}', space=vmem, size = 0x2000, scoped, tag = 'input window, operand 0, single buffered']
    #allocation3 [shape = 's32[1]{0}', space=sflag, size = 0x4, scoped, tag = 'scoped memory for tpu_custom_call.1']
    #allocation4 [shape = 's32[1]{0}', space=sflag, size = 0x4, scoped, tag = 'scoped memory for tpu_custom_call.1']
    #allocation5 [shape = 's32[1]{0}', space=sflag, size = 0x4, scoped, tag = 'scoped memory for tpu_custom_call.1']
    #allocation6 [shape = 's32[1]{0}', space=sflag, size = 0x4, scoped, tag = 'scoped memory for tpu_custom_call.1']
    #allocation7 [shape = 'u8[1024]{0}', space=smem, size = 0x400, scoped, tag = 'input window, operand 1, single buffered']
    #allocation8 [shape = 'u8[512]{0}', space=smem, size = 0x200, scoped, tag = 'input window, operand 2, single buffered']
    #allocation9 [shape = 'u8[512]{0}', space=smem, size = 0x200, scoped, tag = 'input window, operand 3, single buffered']
    #allocation10 [shape = 's32[1]{0}', space=sflag, size = 0x4, scoped, tag = 'scoped memory for tpu_custom_call.1']
    #allocation11 [shape = 'u8[1024]{0}', space=smem, size = 0x400, scoped, tag = 'input window, operand 4, single buffered']
    #allocation12 [shape = 's32[1]{0}', space=sflag, size = 0x4, scoped, tag = 'scoped memory for tpu_custom_call.1']
    #allocation13 [shape = 'u8[512]{0}', space=smem, size = 0x200, scoped, tag = 'input window, operand 5, single buffered']
    #allocation14 [shape = 'u8[512]{0}', space=smem, size = 0x200, scoped, tag = 'input window, operand 6, single buffered']
    #allocation15 [shape = 's32[1]{0}', space=sflag, size = 0x4, scoped, tag = 'scoped memory for tpu_custom_call.1']
    #allocation16 [shape = 'u8[1024]{0}', space=smem, size = 0x400, scoped, tag = 'input window, operand 7, single buffered']
    #allocation17 [shape = 'u8[512]{0}', space=smem, size = 0x200, scoped, tag = 'input window, operand 8, single buffered']
    #allocation18 [shape = 's32[1]{0}', space=sflag, size = 0x4, scoped, tag = 'scoped memory for tpu_custom_call.1']
    #allocation19 [shape = 'u8[512]{0}', space=smem, size = 0x200, scoped, tag = 'input window, operand 9, single buffered']
    #allocation20 [shape = 'u8[8192]{0}', space=vmem, size = 0x2000, scoped, tag = 'output window, operand 0, single buffered']
    %15 = vsyncpa [#allocation3], 0
    %16 = vsyncpa [#allocation5], 0
    %17 = vsyncpa [#allocation6], 0
    %18 = vsyncpa [#allocation10], 0
    %19 = vsyncpa [#allocation12], 0
    %20 = vsyncpa [#allocation15], 0
    %21 = vsyncpa [#allocation18], 0
    %22 = vsyncpa [#allocation4], 0
    // Predicated region
    $region2: #{tpu_custom_call.1} parent=1 // pred_check
      _
    $region3: #{tpu_custom_call.1} parent=1 // pred_check_branch
      %24 = sbr.rel (0) target = $region5
    $region4: #{tpu_custom_call.1} parent=1 // pred_region
      %s26 = ssub.s32 256, 256
      %27 = vsyncadd [#allocation3], %s26
      %s28 = sshll.u32 [#allocation2], 4
      %s29 = int_to_ptr.vmem [resolvable:$true] %s28
      %34 = dma.hbm_to_vmem [thread:$0]  %s0, 256, %s29, [#allocation3], 128, 128, 8
    $region5: #{tpu_custom_call.1} parent=1 // pred_fallthru
      _
    // Predicated region
    $region6: #{tpu_custom_call.1} parent=1 // pred_check
      _
    $region7: #{tpu_custom_call.1} parent=1 // pred_check_branch
      %36 = sbr.rel (0) target = $region9
    $region8: #{tpu_custom_call.1} parent=1 // pred_region
      %s38 = ssub.s32 32, 32
      %39 = vsyncadd [#allocation5], %s38
      %42 = dma.hbm_to_smem %s1, 32, [#allocation7], [#allocation5]
    $region9: #{tpu_custom_call.1} parent=1 // pred_fallthru
      _
    // Predicated region
    $region10: #{tpu_custom_call.1} parent=1 // pred_check
      _
    $region11: #{tpu_custom_call.1} parent=1 // pred_check_branch
      %44 = sbr.rel (0) target = $region13
    $region12: #{tpu_custom_call.1} parent=1 // pred_region
      %s46 = ssub.s32 16, 16
      %47 = vsyncadd [#allocation6], %s46
      %s49 = sshll.u32 %s2, 4
      %s50 = int_to_ptr.vmem [resolvable:$true] %s49
      %52 = dma.vmem_to_smem %s50, 16, [#allocation8], [#allocation6]
    $region13: #{tpu_custom_call.1} parent=1 // pred_fallthru
      _
    // Predicated region
    $region14: #{tpu_custom_call.1} parent=1 // pred_check
      _
    $region15: #{tpu_custom_call.1} parent=1 // pred_check_branch
      %54 = sbr.rel (0) target = $region17
    $region16: #{tpu_custom_call.1} parent=1 // pred_region
      %s56 = ssub.s32 16, 16
      %57 = vsyncadd [#allocation10], %s56
      %60 = dma.hbm_to_smem %s3, 16, [#allocation9], [#allocation10]
    $region17: #{tpu_custom_call.1} parent=1 // pred_fallthru
      _
    // Predicated region
    $region18: #{tpu_custom_call.1} parent=1 // pred_check
      _
    $region19: #{tpu_custom_call.1} parent=1 // pred_check_branch
      %62 = sbr.rel (0) target = $region21
    $region20: #{tpu_custom_call.1} parent=1 // pred_region
      %s64 = ssub.s32 32, 32
      %65 = vsyncadd [#allocation12], %s64
      %s67 = sshll.u32 %s4, 4
      %s68 = int_to_ptr.vmem [resolvable:$true] %s67
      %70 = dma.vmem_to_smem %s68, 32, [#allocation11], [#allocation12]
    $region21: #{tpu_custom_call.1} parent=1 // pred_fallthru
      _
    // Predicated region
    $region22: #{tpu_custom_call.1} parent=1 // pred_check
      _
    $region23: #{tpu_custom_call.1} parent=1 // pred_check_branch
      %72 = sbr.rel (0) target = $region25
    $region24: #{tpu_custom_call.1} parent=1 // pred_region
      %s74 = ssub.s32 16, 16
      %75 = vsyncadd [#allocation12], %s74
      %s77 = sshll.u32 %s5, 4
      %s78 = int_to_ptr.vmem [resolvable:$true] %s77
      %80 = dma.vmem_to_smem %s78, 16, [#allocation13], [#allocation12]
    $region25: #{tpu_custom_call.1} parent=1 // pred_fallthru
      _
    // Predicated region
    $region26: #{tpu_custom_call.1} parent=1 // pred_check
      _
    $region27: #{tpu_custom_call.1} parent=1 // pred_check_branch
      %82 = sbr.rel (0) target = $region29
    $region28: #{tpu_custom_call.1} parent=1 // pred_region
      %s84 = ssub.s32 16, 16
      %85 = vsyncadd [#allocation15], %s84
      %s87 = sshll.u32 %s6, 4
      %s88 = int_to_ptr.vmem [resolvable:$true] %s87
      %90 = dma.vmem_to_smem %s88, 16, [#allocation14], [#allocation15]
    $region29: #{tpu_custom_call.1} parent=1 // pred_fallthru
      _
    // Predicated region
    $region30: #{tpu_custom_call.1} parent=1 // pred_check
      _
    $region31: #{tpu_custom_call.1} parent=1 // pred_check_branch
      %92 = sbr.rel (0) target = $region33
    $region32: #{tpu_custom_call.1} parent=1 // pred_region
      %s94 = ssub.s32 32, 32
      %95 = vsyncadd [#allocation15], %s94
      %s97 = sshll.u32 %s7, 4
      %s98 = int_to_ptr.vmem [resolvable:$true] %s97
      %100 = dma.vmem_to_smem %s98, 32, [#allocation16], [#allocation15]
    $region33: #{tpu_custom_call.1} parent=1 // pred_fallthru
      _
    // Predicated region
    $region34: #{tpu_custom_call.1} parent=1 // pred_check
      _
    $region35: #{tpu_custom_call.1} parent=1 // pred_check_branch
      %102 = sbr.rel (0) target = $region37
    $region36: #{tpu_custom_call.1} parent=1 // pred_region
      %s104 = ssub.s32 16, 16
      %105 = vsyncadd [#allocation18], %s104
      %s107 = sshll.u32 %s8, 4
      %s108 = int_to_ptr.vmem [resolvable:$true] %s107
      %110 = dma.vmem_to_smem %s108, 16, [#allocation17], [#allocation18]
    $region37: #{tpu_custom_call.1} parent=1 // pred_fallthru
      _
    // Predicated region
    $region38: #{tpu_custom_call.1} parent=1 // pred_check
      _
    $region39: #{tpu_custom_call.1} parent=1 // pred_check_branch
      %112 = sbr.rel (0) target = $region41
    $region40: #{tpu_custom_call.1} parent=1 // pred_region
      %s114 = ssub.s32 16, 16
      %115 = vsyncadd [#allocation18], %s114
      %s117 = sshll.u32 %s9, 4
      %s118 = int_to_ptr.vmem [resolvable:$true] %s117
      %120 = dma.vmem_to_smem %s118, 16, [#allocation19], [#allocation18]
    $region41: #{tpu_custom_call.1} parent=1 // pred_fallthru
      _
    // Predicated region
    $region42: #{tpu_custom_call.1} parent=1 // pred_check
      _
    $region43: #{tpu_custom_call.1} parent=1 // pred_check_branch
      %122 = sbr.rel (0) target = $region45
    $region44: #{tpu_custom_call.1} parent=1 // pred_region
      %123 = dma.done [#allocation3], 256
    $region45: #{tpu_custom_call.1} parent=1 // pred_fallthru
      _
    // Predicated region
    $region46: #{tpu_custom_call.1} parent=1 // pred_check
      _
    $region47: #{tpu_custom_call.1} parent=1 // pred_check_branch
      %125 = sbr.rel (0) target = $region49
    $region48: #{tpu_custom_call.1} parent=1 // pred_region
      %126 = dma.done [#allocation5], 32
    $region49: #{tpu_custom_call.1} parent=1 // pred_fallthru
      _
    // Predicated region
    $region50: #{tpu_custom_call.1} parent=1 // pred_check
      _
    $region51: #{tpu_custom_call.1} parent=1 // pred_check_branch
      %128 = sbr.rel (0) target = $region53
    $region52: #{tpu_custom_call.1} parent=1 // pred_region
      %129 = dma.done [#allocation6], 16
    $region53: #{tpu_custom_call.1} parent=1 // pred_fallthru
      _
    // Predicated region
    $region54: #{tpu_custom_call.1} parent=1 // pred_check
      _
    $region55: #{tpu_custom_call.1} parent=1 // pred_check_branch
      %131 = sbr.rel (0) target = $region57
    $region56: #{tpu_custom_call.1} parent=1 // pred_region
      %132 = dma.done [#allocation10], 16
    $region57: #{tpu_custom_call.1} parent=1 // pred_fallthru
      _
    // Predicated region
    $region58: #{tpu_custom_call.1} parent=1 // pred_check
      _
    $region59: #{tpu_custom_call.1} parent=1 // pred_check_branch
      %134 = sbr.rel (0) target = $region61
    $region60: #{tpu_custom_call.1} parent=1 // pred_region
      %135 = dma.done [#allocation12], 32
    $region61: #{tpu_custom_call.1} parent=1 // pred_fallthru
      _
    // Predicated region
    $region62: #{tpu_custom_call.1} parent=1 // pred_check
      _
    $region63: #{tpu_custom_call.1} parent=1 // pred_check_branch
      %137 = sbr.rel (0) target = $region65
    $region64: #{tpu_custom_call.1} parent=1 // pred_region
      %138 = dma.done [#allocation12], 16
    $region65: #{tpu_custom_call.1} parent=1 // pred_fallthru
      _
    // Predicated region
    $region66: #{tpu_custom_call.1} parent=1 // pred_check
      _
    $region67: #{tpu_custom_call.1} parent=1 // pred_check_branch
      %140 = sbr.rel (0) target = $region69
    $region68: #{tpu_custom_call.1} parent=1 // pred_region
      %141 = dma.done [#allocation15], 16
    $region69: #{tpu_custom_call.1} parent=1 // pred_fallthru
      _
    // Predicated region
    $region70: #{tpu_custom_call.1} parent=1 // pred_check
      _
    $region71: #{tpu_custom_call.1} parent=1 // pred_check_branch
      %143 = sbr.rel (0) target = $region73
    $region72: #{tpu_custom_call.1} parent=1 // pred_region
      %144 = dma.done [#allocation15], 32
    $region73: #{tpu_custom_call.1} parent=1 // pred_fallthru
      _
    // Predicated region
    $region74: #{tpu_custom_call.1} parent=1 // pred_check
      _
    $region75: #{tpu_custom_call.1} parent=1 // pred_check_branch
      %146 = sbr.rel (0) target = $region77
    $region76: #{tpu_custom_call.1} parent=1 // pred_region
      %147 = dma.done [#allocation18], 16
    $region77: #{tpu_custom_call.1} parent=1 // pred_fallthru
      _
    // Predicated region
    $region78: #{tpu_custom_call.1} parent=1 // pred_check
      _
    $region79: #{tpu_custom_call.1} parent=1 // pred_check_branch
      %149 = sbr.rel (0) target = $region81
    $region80: #{tpu_custom_call.1} parent=1 // pred_region
      %150 = dma.done [#allocation18], 16
    $region81: #{tpu_custom_call.1} parent=1 // pred_fallthru
      _
    %151 = sfence
    %v152 = vld [vmem:[#allocation2] sm:$0xff]
    %v153 = vld [vmem:[#allocation2 + $0x8] sm:$0xff]
    %v154 = vlaneseq
    %v155 = vand.u32 %v154, 127
    %v156 = vlaneseq
    %v157 = vshrl.u32 %v156, 7
    %v158 = vadd.s32 %v157, 8
    %vm159 = vcmp.lt.s32.totalorder %v155, 0
    %v160 = vsub.s32 0, %v155
    %v161 = vsel %vm159, %v160, %v155
    %v162 = vshrl.u32 %v161, 4
    %v163 = vand.u32 %v161, 15
    %v164 = vsub.s32 0, %v163
    %v165 = vsel %vm159, %v164, %v163
    %vm166 = vcmp.ne.s32.totalorder %v165, 0
    %vm167 = vcmp.lt.s32.totalorder %v165, 0
    %vm168 = vmand %vm167, %vm166
    %v169 = vadd.s32 %v165, 16
    %v170 = vsel %vm168, %v169, %v165
    %vm171 = vcmp.lt.s32.totalorder %v155, 64
    %vm172 = vcmp.lt.s32.totalorder %v155, 0
    %v173 = vsub.s32 0, %v155
    %v174 = vsel %vm172, %v173, %v155
    %v175 = vshrl.u32 %v174, 6
    %v176 = vand.u32 %v174, 63
    %v177 = vsub.s32 0, %v176
    %v178 = vsel %vm172, %v177, %v176
    %vm179 = vcmp.ne.s32.totalorder %v178, 0
    %vm180 = vcmp.lt.s32.totalorder %v178, 0
    %vm181 = vmand %vm180, %vm179
    %v182 = vadd.s32 %v178, 64
    %v183 = vsel %vm181, %v182, %v178
    %vm184 = vcmp.lt.s32.totalorder %v183, 32
    %185 = vrot.lane.b32.xlu0 %v152, 64
    %v186 = vpop.permute.xlu0 %185
    %187 = vrot.lane.b32.xlu0 %v153, 64
    %v188 = vpop.permute.xlu0 %187
    %s189 = sld [smem:[#allocation7]]
    %s190 = sld [smem:[#allocation7 + $0x81]]
    %v191 = vstv %s189
    %v192 = vstv %s190
    %v193 = vsel %vm171, %v191, %v192
    %v194 = vmul.f32 %v193, %v152
    %v195 = vmul.f32 %v193, %v153
    %s196 = sld [smem:[#allocation7 + $0x1]]
    %s197 = sld [smem:[#allocation7 + $0x80]]
    %v198 = vstv %s196
    %v199 = vstv %s197
    %v200 = vsel %vm171, %v198, %v199
    %v201 = vmul.f32 %v200, %v186
    %v202 = vmul.f32 %v200, %v188
    %v203 = vadd.f32 %v194, %v201
    %v204 = vadd.f32 %v195, %v202
    %s205 = sld [smem:[#allocation8]]
    %s206 = sld [smem:[#allocation8 + $0x1]]
    %v207 = vstv %s205
    %v208 = vstv %s206
    %v209 = vsel %vm171, %v207, %v208
    %v210 = vmul.f32 %v209, %v203
    %v211 = vmul.f32 %v209, %v204
    %s212 = sld [smem:[#allocation9]]
    %s213 = sld [smem:[#allocation9 + $0x1]]
    %v214 = vstv %s212
    %v215 = vstv %s213
    %v216 = vsel %vm171, %v214, %v215
    %v217 = vadd.f32 %v210, %v216
    %v218 = vadd.f32 %v211, %v216
    %v219 = vmax.f32 %v217, 0.0
    %v220 = vmax.f32 %v218, 0.0
    %v221 = vadd.s32 %v157, 4294967295
    %v222 = vadd.s32 %v158, 4294967295
    %vm223 = vcmp.ge.s32.totalorder %v221, 0
    %vm224 = vcmp.ge.s32.totalorder %v222, 0
    %vm225 = vcmp.lt.s32.totalorder %v221, 16
    %vm226 = vcmp.lt.s32.totalorder %v222, 16
    %vm227 = vmand %vm223, %vm225
    %vm228 = vmand %vm224, %vm226
    %v229 = vrot.slane %v219, 7
    %v230 = vrot.slane %v220, 7
    %vm231 = vcmp.lt.s32.totalorder %v157, 1
    %v232 = vsel %vm231, %v229, %v230
    %v233 = vsel %vm231, %v230, %v229
    %v234 = vadd.s32 %v170, 4294967295
    %vm235 = vcmp.ge.s32.totalorder %v234, 0
    %vm236 = vmand %vm227, %vm235
    %vm237 = vmand %vm228, %vm235
    %vm238 = vcmp.lt.s32.totalorder %v234, 16
    %vm239 = vmand %vm236, %vm238
    %vm240 = vmand %vm237, %vm238
    %241 = vrot.lane.b32.xlu0 %v233, 1
    %v242 = vpop.permute.xlu0 %241
    %243 = vrot.lane.b32.xlu0 %v232, 1
    %v244 = vpop.permute.xlu0 %243
    %s245 = sld [smem:[#allocation11]]
    %s246 = sld [smem:[#allocation11 + $0x80]]
    %v247 = vstv %s245
    %v248 = vstv %s246
    %v249 = vsel %vm171, %v247, %v248
    %v250 = vmul.f32 %v249, %v242
    %v251 = vmul.f32 %v249, %v244
    %v252 = vsel %vm239, %v250, 0.0
    %v253 = vsel %vm240, %v251, 0.0
    %v254 = vadd.f32 %v252, 0.0
    %v255 = vadd.f32 %v253, 0.0
    %vm256 = vcmp.ge.s32.totalorder %v170, 0
    %vm257 = vmand %vm227, %vm256
    %vm258 = vmand %vm228, %vm256
    %vm259 = vcmp.lt.s32.totalorder %v170, 16
    %vm260 = vmand %vm257, %vm259
    %vm261 = vmand %vm258, %vm259
    %s262 = sld [smem:[#allocation11 + $0x1]]
    %s263 = sld [smem:[#allocation11 + $0x81]]
    %v264 = vstv %s262
    %v265 = vstv %s263
    %v266 = vsel %vm171, %v264, %v265
    %v267 = vmul.f32 %v266, %v233
    %v268 = vmul.f32 %v266, %v232
    %v269 = vsel %vm260, %v267, 0.0
    %v270 = vsel %vm261, %v268, 0.0
    %v271 = vadd.f32 %v254, %v269
    %v272 = vadd.f32 %v255, %v270
    %v273 = vadd.s32 %v170, 1
    %vm274 = vcmp.ge.s32.totalorder %v273, 0
    %vm275 = vmand %vm227, %vm274
    %vm276 = vmand %vm228, %vm274
    %vm277 = vcmp.lt.s32.totalorder %v273, 16
    %vm278 = vmand %vm275, %vm277
    %vm279 = vmand %vm276, %vm277
    %280 = vrot.lane.b32.xlu0 %v233, 127
    %v281 = vpop.permute.xlu0 %280
    %282 = vrot.lane.b32.xlu0 %v232, 127
    %v283 = vpop.permute.xlu0 %282
    %s284 = sld [smem:[#allocation11 + $0x2]]
    %s285 = sld [smem:[#allocation11 + $0x82]]
    %v286 = vstv %s284
    %v287 = vstv %s285
    %v288 = vsel %vm171, %v286, %v287
    %v289 = vmul.f32 %v288, %v281
    %v290 = vmul.f32 %v288, %v283
    %v291 = vsel %vm278, %v289, 0.0
    %v292 = vsel %vm279, %v290, 0.0
    %v293 = vadd.f32 %v271, %v291
    %v294 = vadd.f32 %v272, %v292
    %vm295 = vcmp.ge.s32.totalorder %v157, 0
    %vm296 = vcmp.ge.s32.totalorder %v158, 0
    %vm297 = vcmp.lt.s32.totalorder %v157, 16
    %vm298 = vcmp.lt.s32.totalorder %v158, 16
    %vm299 = vmand %vm295, %vm297
    %vm300 = vmand %vm296, %vm298
    %vm301 = vmand %vm299, %vm235
    %vm302 = vmand %vm300, %vm235
    %vm303 = vmand %vm301, %vm238
    %vm304 = vmand %vm302, %vm238
    %305 = vrot.lane.b32.xlu0 %v219, 1
    %v306 = vpop.permute.xlu0 %305
    %307 = vrot.lane.b32.xlu0 %v220, 1
    %v308 = vpop.permute.xlu0 %307
    %s309 = sld [smem:[#allocation11 + $0x3]]
    %s310 = sld [smem:[#allocation11 + $0x83]]
    %v311 = vstv %s309
    %v312 = vstv %s310
    %v313 = vsel %vm171, %v311, %v312
    %v314 = vmul.f32 %v313, %v306
    %v315 = vmul.f32 %v313, %v308
    %v316 = vsel %vm303, %v314, 0.0
    %v317 = vsel %vm304, %v315, 0.0
    %v318 = vadd.f32 %v293, %v316
    %v319 = vadd.f32 %v294, %v317
    %vm320 = vmand %vm299, %vm256
    %vm321 = vmand %vm300, %vm256
    %vm322 = vmand %vm320, %vm259
    %vm323 = vmand %vm321, %vm259
    %s324 = sld [smem:[#allocation11 + $0x4]]
    %s325 = sld [smem:[#allocation11 + $0x84]]
    %v326 = vstv %s324
    %v327 = vstv %s325
    %v328 = vsel %vm171, %v326, %v327
    %v329 = vmul.f32 %v328, %v219
    %v330 = vmul.f32 %v328, %v220
    %v331 = vsel %vm322, %v329, 0.0
    %v332 = vsel %vm323, %v330, 0.0
    %v333 = vadd.f32 %v318, %v331
    %v334 = vadd.f32 %v319, %v332
    %vm335 = vmand %vm299, %vm274
    %vm336 = vmand %vm300, %vm274
    %vm337 = vmand %vm335, %vm277
    %vm338 = vmand %vm336, %vm277
    %339 = vrot.lane.b32.xlu0 %v219, 127
    %v340 = vpop.permute.xlu0 %339
    %341 = vrot.lane.b32.xlu0 %v220, 127
    %v342 = vpop.permute.xlu0 %341
    %s343 = sld [smem:[#allocation11 + $0x5]]
    %s344 = sld [smem:[#allocation11 + $0x85]]
    %v345 = vstv %s343
    %v346 = vstv %s344
    %v347 = vsel %vm171, %v345, %v346
    %v348 = vmul.f32 %v347, %v340
    %v349 = vmul.f32 %v347, %v342
    %v350 = vsel %vm337, %v348, 0.0
    %v351 = vsel %vm338, %v349, 0.0
    %v352 = vadd.f32 %v333, %v350
    %v353 = vadd.f32 %v334, %v351
    %v354 = vadd.s32 %v157, 1
    %v355 = vadd.s32 %v158, 1
    %vm356 = vcmp.ge.s32.totalorder %v354, 0
    %vm357 = vcmp.ge.s32.totalorder %v355, 0
    %vm358 = vcmp.lt.s32.totalorder %v354, 16
    %vm359 = vcmp.lt.s32.totalorder %v355, 16
    %vm360 = vmand %vm356, %vm358
    %vm361 = vmand %vm357, %vm359
    %v362 = vrot.slane %v219, 1
    %v363 = vrot.slane %v220, 1
    %vm364 = vcmp.lt.s32.totalorder %v157, 7
    %v365 = vsel %vm364, %v362, %v363
    %v366 = vsel %vm364, %v363, %v362
    %vm367 = vmand %vm360, %vm235
    %vm368 = vmand %vm361, %vm235
    %vm369 = vmand %vm367, %vm238
    %vm370 = vmand %vm368, %vm238
    %371 = vrot.lane.b32.xlu0 %v365, 1
    %v372 = vpop.permute.xlu0 %371
    %373 = vrot.lane.b32.xlu0 %v366, 1
    %v374 = vpop.permute.xlu0 %373
    %s375 = sld [smem:[#allocation11 + $0x6]]
    %s376 = sld [smem:[#allocation11 + $0x86]]
    %v377 = vstv %s375
    %v378 = vstv %s376
    %v379 = vsel %vm171, %v377, %v378
    %v380 = vmul.f32 %v379, %v372
    %v381 = vmul.f32 %v379, %v374
    %v382 = vsel %vm369, %v380, 0.0
    %v383 = vsel %vm370, %v381, 0.0
    %v384 = vadd.f32 %v352, %v382
    %v385 = vadd.f32 %v353, %v383
    %vm386 = vmand %vm360, %vm256
    %vm387 = vmand %vm361, %vm256
    %vm388 = vmand %vm386, %vm259
    %vm389 = vmand %vm387, %vm259
    %s390 = sld [smem:[#allocation11 + $0x7]]
    %s391 = sld [smem:[#allocation11 + $0x87]]
    %v392 = vstv %s390
    %v393 = vstv %s391
    %v394 = vsel %vm171, %v392, %v393
    %v395 = vmul.f32 %v394, %v365
    %v396 = vmul.f32 %v394, %v366
    %v397 = vsel %vm388, %v395, 0.0
    %v398 = vsel %vm389, %v396, 0.0
    %v399 = vadd.f32 %v384, %v397
    %v400 = vadd.f32 %v385, %v398
    %vm401 = vmand %vm360, %vm274
    %vm402 = vmand %vm361, %vm274
    %vm403 = vmand %vm401, %vm277
    %vm404 = vmand %vm402, %vm277
    %405 = vrot.lane.b32.xlu0 %v365, 127
    %v406 = vpop.permute.xlu0 %405
    %407 = vrot.lane.b32.xlu0 %v366, 127
    %v408 = vpop.permute.xlu0 %407
    %s409 = sld [smem:[#allocation11 + $0x8]]
    %s410 = sld [smem:[#allocation11 + $0x88]]
    %v411 = vstv %s409
    %v412 = vstv %s410
    %v413 = vsel %vm171, %v411, %v412
    %v414 = vmul.f32 %v413, %v406
    %v415 = vmul.f32 %v413, %v408
    %v416 = vsel %vm403, %v414, 0.0
    %v417 = vsel %vm404, %v415, 0.0
    %v418 = vadd.f32 %v399, %v416
    %v419 = vadd.f32 %v400, %v417
    %s420 = sld [smem:[#allocation13]]
    %s421 = sld [smem:[#allocation13 + $0x1]]
    %v422 = vstv %s420
    %v423 = vstv %s421
    %v424 = vsel %vm171, %v422, %v423
    %v425 = vmul.f32 %v424, %v418
    %v426 = vmul.f32 %v424, %v419
    %s427 = sld [smem:[#allocation14]]
    %s428 = sld [smem:[#allocation14 + $0x1]]
    %v429 = vstv %s427
    %v430 = vstv %s428
    %v431 = vsel %vm171, %v429, %v430
    %v432 = vadd.f32 %v425, %v431
    %v433 = vadd.f32 %v426, %v431
    %v434 = vmax.f32 %v432, 0.0
    %v435 = vmax.f32 %v433, 0.0
    %436 = vrot.lane.b32.xlu0 %v434, 64
    %v437 = vpop.permute.xlu0 %436
    %438 = vrot.lane.b32.xlu0 %v435, 64
    %v439 = vpop.permute.xlu0 %438
    %s440 = sld [smem:[#allocation16]]
    %s441 = sld [smem:[#allocation16 + $0x81]]
    %v442 = vstv %s440
    %v443 = vstv %s441
    %v444 = vsel %vm171, %v442, %v443
    %v445 = vmul.f32 %v444, %v434
    %v446 = vmul.f32 %v444, %v435
    %s447 = sld [smem:[#allocation16 + $0x1]]
    %s448 = sld [smem:[#allocation16 + $0x80]]
    %v449 = vstv %s447
    %v450 = vstv %s448
    %v451 = vsel %vm171, %v449, %v450
    %v452 = vmul.f32 %v451, %v437
    %v453 = vmul.f32 %v451, %v439
    %v454 = vadd.f32 %v445, %v452
    %v455 = vadd.f32 %v446, %v453
    %s456 = sld [smem:[#allocation17]]
    %s457 = sld [smem:[#allocation17 + $0x1]]
    %v458 = vstv %s456
    %v459 = vstv %s457
    %v460 = vsel %vm171, %v458, %v459
    %v461 = vmul.f32 %v460, %v454
    %v462 = vmul.f32 %v460, %v455
    %s463 = sld [smem:[#allocation19]]
    %s464 = sld [smem:[#allocation19 + $0x1]]
    %v465 = vstv %s463
    %v466 = vstv %s464
    %v467 = vsel %vm171, %v465, %v466
    %v468 = vadd.f32 %v461, %v467
    %v469 = vadd.f32 %v462, %v467
    %v470 = vmax.f32 %v468, 0.0
    %v471 = vmax.f32 %v469, 0.0
    %v472 = vsel %vm184, %v470, %v152
    %v473 = vsel %vm184, %v471, %v153
    %474 = vst [vmem:[#allocation20] sm:$0xff] %v472
    %475 = vst [vmem:[#allocation20 + $0x8] sm:$0xff] %v473
    // Predicated region
    $region82: #{tpu_custom_call.1} parent=1 // pred_check
      _
    $region83: #{tpu_custom_call.1} parent=1 // pred_check_branch
      %477 = sbr.rel (0) target = $region85
    $region84: #{tpu_custom_call.1} parent=1 // pred_region
      %s479 = ssub.s32 256, 256
      %480 = vsyncadd [#allocation4], %s479
      %s481 = sshll.u32 [#allocation20], 4
      %s482 = int_to_ptr.vmem [resolvable:$true] %s481
      %487 = dma.vmem_to_hbm [thread:$0]  %s482, 256, %s10, [#allocation4], 128, 128, 8
    $region85: #{tpu_custom_call.1} parent=1 // pred_fallthru
      _
    // Predicated region
    $region86: #{tpu_custom_call.1} parent=1 // pred_check
      _
    $region87: #{tpu_custom_call.1} parent=1 // pred_check_branch
      %489 = sbr.rel (0) target = $region89
    $region88: #{tpu_custom_call.1} parent=1 // pred_region
      %490 = dma.done [#allocation4], 256
    $region89: #{tpu_custom_call.1} parent=1 // pred_fallthru
      _
    %491 = vsyncpa [#allocation3], 1
    %492 = vsyncpa [#allocation4], 1
    %493 = vsyncpa [#allocation5], 1
    %494 = vsyncpa [#allocation10], 1
    %495 = vsyncpa [#allocation6], 1
    %496 = vsyncpa [#allocation12], 1
    %497 = vsyncpa [#allocation15], 1
    %498 = vsyncpa [#allocation18], 1

</llo_original>
